<compile_context>
chip_gen: v5e
topology: v5e:2x2
jax: 0.10.0
libtpu: 0.0.40
codegen_flags: <defaults>
</compile_context>

<pallas_src>
import math

import jax
import jax.numpy as jnp
from jax.experimental import pallas as pl
from jax.experimental.pallas import tpu as pltpu


def _rowsum_kernel(x_ref, out_ref, acc_ref):
    """Accumulate f32 row sums of x tiles across the vocab grid axis (axis 1)."""
    j = pl.program_id(1)

    # Bulk reduction on the (otherwise idle) MXU: (TM, TV) @ (TV, 1) -> (TM, 1)
    # f32.  bf16 feeds the MXU directly, so there is no whole-tile VPU upcast;
    # the ones splat is a loop-invariant constant.
    ones = jnp.ones((x_ref.shape[1], 1), dtype=x_ref.dtype)
    rs = jnp.dot(x_ref[...], ones, preferred_element_type=jnp.float32)

    @pl.when(j == 0)
    def _init():
        acc_ref[...] = jnp.zeros_like(acc_ref)

    acc_ref[...] += rs

    @pl.when(j == pl.num_programs(1) - 1)
    def _store():
        out_ref[...] = acc_ref[...]


def _round_up(x, m):
    return (x + m - 1) // m * m


def _largest_divisor_tile(total, preferred, align):
    """Largest multiple of `align` that divides `total` and is <= `preferred`.

    `total` must already be a multiple of `align`, so `align` always works.
    """
    t = min(preferred, total)
    t -= t % align
    while t > align and total % t != 0:
        t -= align
    return max(t, align)


def _row_sums(x, *, block_rows, block_cols):
    """(N,) f32 row sums of x via a tiled, memory-bound Pallas TPU kernel."""
    N, V = x.shape
    itemsize = jnp.dtype(x.dtype).itemsize
    row_align = max(8, 32 // itemsize)  # packed sublanes: 8 (f32) / 16 (bf16)

    # ---- vocab (lane / reduction) axis -------------------------------------
    block_cols = max(128, _round_up(block_cols, 128))
    v128 = _round_up(V, 128)
    tv = _largest_divisor_tile(v128, block_cols, 128)
    if tv < min(v128, block_cols, 1024):
        # Awkward factorisation (e.g. V = 50257): pad up to a multiple of a
        # full-size tile instead of degenerating to tiny tiles.
        tv = min(block_cols, v128)
    v_pad = _round_up(V, tv)

    # ---- row (sublane / parallel) axis --------------------------------------
    block_rows = max(row_align, _round_up(block_rows, row_align))
    n_al = _round_up(N, row_align)
    tm = _largest_divisor_tile(n_al, block_rows, row_align)
    if tm < min(n_al, block_rows, 64):
        tm = min(block_rows, n_al)
    n_pad = _round_up(N, tm)
    # v7x megacore: keep the "parallel" row axis splittable across 2 TCs.
    if n_pad // tm < 2 and tm > row_align:
        tm = max(row_align, (tm // 2) // row_align * row_align)
        n_pad = _round_up(N, tm)

    if (n_pad, v_pad) != (N, V):
        # TODO(synk): for very ragged vocab sizes this materialises a padded
        # copy of x (extra HBM pass); an in-kernel last-tile mask would avoid it.
        x = jnp.pad(x, ((0, n_pad - N), (0, v_pad - V)))

    grid = (n_pad // tm, v_pad // tv)
    x_block_bytes = tm * tv * itemsize
    # Double-buffered x block + small scratch/output, with headroom; explicit so
    # 4 MiB blocks also fit v5e's 16 MiB default scoped VMEM.
    vmem_limit = int(min(max(4 * x_block_bytes + (4 << 20), 16 << 20), 60 << 20))

    out = pl.pallas_call(
        _rowsum_kernel,
        out_shape=jax.ShapeDtypeStruct((n_pad, 1), jnp.float32),
        grid=grid,
        in_specs=[pl.BlockSpec((tm, tv), lambda i, j: (i, j))],
        out_specs=pl.BlockSpec((tm, 1), lambda i, j: (i, 0)),
        scratch_shapes=[pltpu.VMEM((tm, 1), jnp.float32)],
        compiler_params=pltpu.CompilerParams(
            dimension_semantics=("parallel", "arbitrary"),
            vmem_limit_bytes=vmem_limit),
        cost_estimate=pl.CostEstimate(
            flops=2 * n_pad * v_pad,
            bytes_accessed=n_pad * v_pad * itemsize + n_pad * 4,
            transcendentals=0),
    )(x)
    return out[:N, 0]


def label_smoothing_loss(x, target, *, size, padding_idx, smoothing,
                         block_rows=256, block_cols=8192):
    """KLDivLoss(reduction='sum') of log-probs x vs. the label-smoothed target
    distribution — equivalent to PyTorch LabelSmoothing.forward.

    x:      (N, size) float log-probabilities (f32 or bf16, read natively).
    target: (N,) integer class indices.
    Returns a scalar f32 loss.
    """
    N, V = x.shape
    assert V == size
    assert size > 2, "label smoothing requires size > 2"

    confidence = 1.0 - smoothing
    fill_val = smoothing / (size - 2)
    # Compile-time entropy constant sum_c y*log(y) for a non-padding row.
    c_entropy = 0.0
    if confidence > 0.0:
        c_entropy += confidence * math.log(confidence)
    if fill_val > 0.0:
        c_entropy += (size - 2) * fill_val * math.log(fill_val)

    target = target.astype(jnp.int32)

    # O(N*V) part: row sums of x (Pallas kernel, DMA + MXU only).
    rowsum = _row_sums(x, block_rows=block_rows, block_cols=block_cols)

    # O(N) corrections stay in the wrapper (tiny HBM traffic): target-column
    # gather, padding column, row-validity mask.
    x_tgt = jnp.take_along_axis(x, target[:, None], axis=1)[:, 0]
    x_tgt = x_tgt.astype(jnp.float32)
    x_padcol = x[:, padding_idx].astype(jnp.float32)
    valid = (target != padding_idx).astype(jnp.float32)

    per_row = (c_entropy
               - confidence * x_tgt
               - fill_val * (rowsum - x_tgt - x_padcol))
    return jnp.sum(valid * per_row)


def _reference_loss(x32, target, *, size, padding_idx, smoothing):
    """Pure-JAX reference mirroring the original true_dist construction."""
    N, V = x32.shape
    fill_val = smoothing / (size - 2)
    td = jnp.full((N, V), fill_val, dtype=jnp.float32)
    td = td.at[jnp.arange(N), target].set(1.0 - smoothing)
    td = td.at[:, padding_idx].set(0.0)
    td = jnp.where((target == padding_idx)[:, None], 0.0, td)
    safe_log = jnp.log(jnp.where(td > 0, td, 1.0))
    return jnp.sum(jnp.where(td > 0, td * (safe_log - x32), 0.0))


if __name__ == "__main__":
    key = jax.random.PRNGKey(0)
    padding_idx = 0
    smoothing = 0.1
    k1, k2, k3, k4, k5, k6 = jax.random.split(key, 6)

    # ---- test 1: tiny shape (padded internally to (16, 128)), bf16, grid (1,1)
    N1, V1 = 8, 32
    x1 = jax.nn.log_softmax(
        jax.random.normal(k1, (N1, V1), jnp.float32), -1).astype(jnp.bfloat16)
    tgt1 = jax.random.randint(k2, (N1,), 0, V1, jnp.int32).at[3].set(padding_idx)
    loss1 = label_smoothing_loss(x1, tgt1, size=V1, padding_idx=padding_idx,
                                 smoothing=smoothing)
    jax.block_until_ready(loss1)
    ref1 = _reference_loss(x1.astype(jnp.float32), tgt1, size=V1,
                           padding_idx=padding_idx, smoothing=smoothing)
    assert jnp.allclose(loss1, ref1, rtol=2e-2, atol=1e-2), (loss1, ref1)

    # ---- test 2: multi-tile grid (4, 4), bf16, small explicit tiles
    N2, V2 = 128, 512
    x2 = jax.nn.log_softmax(
        jax.random.normal(k3, (N2, V2), jnp.float32), -1).astype(jnp.bfloat16)
    tgt2 = jax.random.randint(k4, (N2,), 0, V2, jnp.int32)
    tgt2 = tgt2.at[7].set(padding_idx).at[100].set(padding_idx)
    loss2 = label_smoothing_loss(x2, tgt2, size=V2, padding_idx=padding_idx,
                                 smoothing=smoothing,
                                 block_rows=32, block_cols=128)
    jax.block_until_ready(loss2)
    ref2 = _reference_loss(x2.astype(jnp.float32), tgt2, size=V2,
                           padding_idx=padding_idx, smoothing=smoothing)
    assert jnp.allclose(loss2, ref2, rtol=2e-2, atol=1e-2), (loss2, ref2)

    # ---- test 3: unaligned shapes (N=10, V=200), f32, default tiles
    N3, V3 = 10, 200
    x3 = jax.nn.log_softmax(jax.random.normal(k5, (N3, V3), jnp.float32), -1)
    tgt3 = jax.random.randint(k6, (N3,), 0, V3, jnp.int32).at[4].set(padding_idx)
    loss3 = label_smoothing_loss(x3, tgt3, size=V3, padding_idx=padding_idx,
                                 smoothing=smoothing)
    jax.block_until_ready(loss3)
    ref3 = _reference_loss(x3, tgt3, size=V3,
                           padding_idx=padding_idx, smoothing=smoothing)
    assert jnp.allclose(loss3, ref3, rtol=1e-4, atol=1e-4), (loss3, ref3)

    print("KERNEL_OK")
</pallas_src>

<mosaic_0001>
module attributes {stable_mosaic.version = 11 : i64} {
  func.func @_rowsum_kernel(%arg0: i32, %arg1: i32, %arg2: memref<16x128xbf16, #tpu.memory_space<vmem>>, %arg3: memref<16x1xf32, #tpu.memory_space<vmem>>, %arg4: memref<16x1xf32, #tpu.memory_space<vmem>>) attributes {dimension_semantics = [#tpu.dimension_semantics<parallel>, #tpu.dimension_semantics<arbitrary>], iteration_bounds = array<i64: 1, 1>, scalar_prefetch = 0 : i64, scratch_operands = 1 : i64, tpu.core_type = #tpu.core_type<tc>, window_params = [{transform_indices = @transform_0, window_bounds = array<i64: 16, 128>}, {transform_indices = @transform_1, window_bounds = array<i64: 16, 1>}]} {
    %cst = arith.constant 1.000000e+00 : bf16
    %0 = vector.broadcast %cst : bf16 to vector<128x1xbf16>
    %c0 = arith.constant 0 : index
    %c0_0 = arith.constant 0 : index
    %1 = vector.load %arg2[%c0, %c0_0] : memref<16x128xbf16, #tpu.memory_space<vmem>>, vector<16x128xbf16>
    %cst_1 = arith.constant dense<0.000000e+00> : vector<16x1xf32>
    %2 = tpu.matmul %1, %0, %cst_1 {dimension_numbers = #tpu.dot_dimension_numbers<[1], [0], [0], [1], [0, 0, 1, 1], [], []>} : vector<16x128xbf16>, vector<128x1xbf16>, vector<16x1xf32> -> vector<16x1xf32>
    %c0_i32 = arith.constant 0 : i32
    %3 = arith.cmpi eq, %arg1, %c0_i32 : i32
    %4 = arith.extui %3 : i1 to i32
    %c0_i32_2 = arith.constant 0 : i32
    %5 = arith.cmpi ne, %4, %c0_i32_2 : i32
    scf.if %5 {
      %cst_9 = arith.constant 0.000000e+00 : f32
      %12 = vector.broadcast %cst_9 : f32 to vector<16x1xf32>
      %c0_10 = arith.constant 0 : index
      %c0_11 = arith.constant 0 : index
      %13 = vector.load %arg4[%c0_10, %c0_11] : memref<16x1xf32, #tpu.memory_space<vmem>>, vector<16x1xf32>
      tpu.vector_store %arg4[%c0_10, %c0_11], %12 {strides = array<i32>} : memref<16x1xf32, #tpu.memory_space<vmem>>, vector<16x1xf32>,
    } else {
    }
    %c0_3 = arith.constant 0 : index
    %c0_4 = arith.constant 0 : index
    %6 = vector.load %arg4[%c0_3, %c0_4] : memref<16x1xf32, #tpu.memory_space<vmem>>, vector<16x1xf32>
    %7 = arith.addf %6, %2 : vector<16x1xf32>
    %c0_5 = arith.constant 0 : index
    %c0_6 = arith.constant 0 : index
    %8 = vector.load %arg4[%c0_5, %c0_6] : memref<16x1xf32, #tpu.memory_space<vmem>>, vector<16x1xf32>
    tpu.vector_store %arg4[%c0_5, %c0_6], %7 {strides = array<i32>} : memref<16x1xf32, #tpu.memory_space<vmem>>, vector<16x1xf32>,
    %c0_i32_7 = arith.constant 0 : i32
    %9 = arith.cmpi eq, %arg1, %c0_i32_7 : i32
    %10 = arith.extui %9 : i1 to i32
    %c0_i32_8 = arith.constant 0 : i32
    %11 = arith.cmpi ne, %10, %c0_i32_8 : i32
    scf.if %11 {
      %c0_9 = arith.constant 0 : index
      %c0_10 = arith.constant 0 : index
      %12 = vector.load %arg4[%c0_9, %c0_10] : memref<16x1xf32, #tpu.memory_space<vmem>>, vector<16x1xf32>
      %c0_11 = arith.constant 0 : index
      %c0_12 = arith.constant 0 : index
      %13 = vector.load %arg3[%c0_11, %c0_12] : memref<16x1xf32, #tpu.memory_space<vmem>>, vector<16x1xf32>
      tpu.vector_store %arg3[%c0_11, %c0_12], %12 {strides = array<i32>} : memref<16x1xf32, #tpu.memory_space<vmem>>, vector<16x1xf32>,
    } else {
    }
    return
  }
  func.func @transform_0(%arg0: i32, %arg1: i32) -> (i32, i32) {
    %c0_i32 = arith.constant 0 : i32
    return %arg0, %arg1 : i32, i32
  }
  func.func @transform_1(%arg0: i32, %arg1: i32) -> (i32, i32) {
    %c0_i32 = arith.constant 0 : i32
    %c0_i32_0 = arith.constant 0 : i32
    return %arg0, %c0_i32 : i32, i32
  }
}

</mosaic_0001>

<llo_original>
// kernel: tpu_custom_call.1
$region0: #{tpu_custom_call.1}
  #allocation0 [shape = 'u32[]', space=smem, size = 0x4, offset = 0x4, fixed_abs, tag = 'smem constant byte address 0x4 - core index']
  #allocation1 [shape = 'u32[72,128]{1,0:T(1,128)}', space=vmem, size = 0x9000, scoped, tag = 'internal scratch']
  #allocation2 [shape = 'f32[16,1]{1,0:T(8,128)}', space=vmem, size = 0x2000, scoped, tag = 'scratch operand']
  %s0 = inlined_call_operand.hbm [shape: bf16[16,128], index: 0, kind: input, shape index: {}]
  %s1 = inlined_call_operand.vmem [shape: f32[16,1], index: 1, kind: output, shape index: {}]
  %s2 = sld [smem:[#allocation0]]
  $region26: #{tpu_custom_call.1} parent=0
    _
  %s4 = ssub.s32 1, %s2
  %s5 = scalar_select 0, %s4, %s2
  $region1: #{tpu_custom_call.1} parent=0
    #allocation3 [shape = 'u8[4096]{0}', space=vmem, size = 0x1000, scoped, tag = 'input window, operand 0, single buffered']
    #allocation4 [shape = 's32[1]{0}', space=sflag, size = 0x4, scoped, tag = 'scoped memory for tpu_custom_call.1']
    %6 = vsyncpa [#allocation4], 0
    // Predicated region
    $region2: #{tpu_custom_call.1} parent=1 // pred_check
      _
    $region3: #{tpu_custom_call.1} parent=1 // pred_check_branch
      %8 = sbr.rel (0) target = $region5
    $region4: #{tpu_custom_call.1} parent=1 // pred_region
      %10 = vsyncadd [#allocation4], 0
      %s11 = sshll.u32 %s0, 4
      %s12 = int_to_ptr.hbm [resolvable:$true] %s11
      %s13 = sshll.u32 [#allocation3], 4
      %s14 = int_to_ptr.vmem [resolvable:$true] %s13
      %19 = dma.hbm_to_vmem [thread:$0]  %s12, 128, %s14, [#allocation4], 64, 64, 4
    $region5: #{tpu_custom_call.1} parent=1 // pred_fallthru
      _
    // Predicated region
    $region6: #{tpu_custom_call.1} parent=1 // pred_check
      _
    $region7: #{tpu_custom_call.1} parent=1 // pred_check_branch
      %21 = sbr.rel (0) target = $region9
    $region8: #{tpu_custom_call.1} parent=1 // pred_region
      %23 = dma.done [#allocation4], 128
    $region9: #{tpu_custom_call.1} parent=1 // pred_fallthru
      _
    %v25 = vld [vmem:[#allocation3] sm:$0xf]
    %v26 = vld [vmem:[#allocation3 + $0x4] sm:$0xf]
    %v29 = vunpack.c.l.b16 %v25
    %v30 = vunpack.c.l.b16 %v26
    %v31 = vpack.c.b16 %v30, %v29
    %33 = vmatpush.bf16.msra.mxu0 1065369472
    %34 = vmatpush.bf16.msra.mxu0 1065369472
    %35 = vmatpush.bf16.msra.mxu0 1065369472
    %36 = vmatpush.bf16.msra.mxu0 1065369472
    %37 = vmatpush.bf16.msra.mxu0 1065369472
    %38 = vmatpush.bf16.msra.mxu0 1065369472
    %39 = vmatpush.bf16.msra.mxu0 1065369472
    %40 = vmatpush.bf16.msra.mxu0 1065369472
    %41 = vmatmul.bf16.gmra.mxu0 %v31
    %v42 = vpop.f32.mrf.mxu0
    %v43 = vadd.f32 0.0, %v42
    %v44 = vpop.f32.mrf.mxu0
    %v45 = vadd.f32 0.0, %v44
    %46 = vdwg.mxu0
    %p47 = scmp.eq.s32.totalorder 0, 0
    // Predicated region
    $region10: #{tpu_custom_call.1} parent=1 // pred_check
      %p48 = pneg %p47
    $region11: #{tpu_custom_call.1} parent=1 // pred_check_branch
      %50 = sbr.rel (%p48) target = $region13
    $region12: #{tpu_custom_call.1} parent=1 // pred_region
      %vm51 = vcmask 7168
      %52 = vst.msk [vmem:[#allocation2] sm:$0xff] %vm51, 0.0
      %53 = vst.msk [vmem:[#allocation2 + $0x8] sm:$0xff] %vm51, 0.0
    $region13: #{tpu_custom_call.1} parent=1 // pred_fallthru
      _
    %v54 = vld [vmem:[#allocation2] sm:$0xff]
    %v55 = vld [vmem:[#allocation2 + $0x8] sm:$0xff]
    %v56 = vadd.f32 %v54, %v43
    %v57 = vadd.f32 %v55, %v45
    %vm58 = vcmask 7168
    %59 = vst.msk [vmem:[#allocation2] sm:$0xff] %vm58, %v56
    %60 = vst.msk [vmem:[#allocation2 + $0x8] sm:$0xff] %vm58, %v57
    // Predicated region
    $region14: #{tpu_custom_call.1} parent=1 // pred_check
      %p61 = pneg %p47
    $region15: #{tpu_custom_call.1} parent=1 // pred_check_branch
      %63 = sbr.rel (%p61) target = $region17
    $region16: #{tpu_custom_call.1} parent=1 // pred_region
      %v64 = vld [vmem:[#allocation2] sm:$0xff]
      %v65 = vld [vmem:[#allocation2 + $0x8] sm:$0xff]
      %66 = vst.msk [vmem:[%s1] sm:$0xff] %vm58, %v64
      %67 = vst.msk [vmem:[%s1 + $0x8] sm:$0xff] %vm58, %v65
    $region17: #{tpu_custom_call.1} parent=1 // pred_fallthru
      _
    // Predicated region
    $region18: #{tpu_custom_call.1} parent=1 // pred_check
      _
    $region19: #{tpu_custom_call.1} parent=1 // pred_check_branch
      %69 = sbr.rel (0) target = $region21
    $region20: #{tpu_custom_call.1} parent=1 // pred_region
      _
    $region21: #{tpu_custom_call.1} parent=1 // pred_fallthru
      _
    // Predicated region
    $region22: #{tpu_custom_call.1} parent=1 // pred_check
      _
    $region23: #{tpu_custom_call.1} parent=1 // pred_check_branch
      %71 = sbr.rel (0) target = $region25
    $region24: #{tpu_custom_call.1} parent=1 // pred_region
      _
    $region25: #{tpu_custom_call.1} parent=1 // pred_fallthru
      _
    %72 = vsyncpa [#allocation4], 1

</llo_original>
